<compile_context>
chip_gen: v5e
topology: v5e:2x2
jax: 0.10.0
libtpu: 0.0.40
codegen_flags: <defaults>
</compile_context>

<pallas_src>
from functools import partial

import jax
import jax.numpy as jnp
from jax.experimental import pallas as pl
from jax.experimental.pallas import tpu as pltpu


# ----------------------------------------------------------------------------- kernel
def decoder_attn_kernel(tok_ref, emb_ref, h0_ref, enc_ref, wa_ref, wih_ref,
                        wout_ref, vecs_ref, logp_ref, hnew_ref, eproj_ref):
    t = pl.program_id(0)
    B, S, H = enc_ref.shape
    Vp = wout_ref.shape[1]

    enc3 = enc_ref[...]                       # (B, S, H) encoder outputs (VMEM-resident)
    wa = wa_ref[...]                          # (2H, H)   attention weight, pre-transposed
    vecs = vecs_ref[...]                      # (4, max(4H, Vp)) packed small vectors
    b_attn = vecs[0:1, :H]                    # (1, H)
    b_lstm = vecs[1:2, :4 * H]                # (1, 4H)  b_ih + b_hh (LSTM starts from 0 state)
    b_out = vecs[2:3, :Vp]                    # (1, Vp)  -1e30 in the lane-pad columns
    v_row = vecs[3:4, :H]                     # (1, H)   attention v

    # ---- step-0 only: step-invariant encoder projection + hidden-carry init ----
    @pl.when(t == 0)
    def _():
        ep = jnp.dot(enc3.reshape(B * S, H), wa[H:, :],
                     preferred_element_type=jnp.float32)       # (B*S, H)
        eproj_ref[...] = ep.reshape(B, S, H) + b_attn          # fold attn bias once
        hnew_ref[...] = h0_ref[...]                            # attention hidden for step 0

    h_prev = hnew_ref[...]                                     # (B, H) carried hidden

    # ---- in-kernel embedding gather (token ids scalar-prefetched into SMEM) ----
    emb = jnp.concatenate(
        [emb_ref[tok_ref[t * B + b]] for b in range(B)], axis=0)   # (B, H)

    # ---- attention: softmax_s( v . tanh(Wa_h h + Wa_e enc + b_attn) ) ----
    h_proj = jnp.dot(h_prev, wa[:H, :], preferred_element_type=jnp.float32)   # (B, H)
    tanh_e = jnp.tanh(eproj_ref[...] + h_proj[:, None, :])                    # (B, S, H)
    # VPU multiply + lane reduction (no N=1 MXU matmul).
    # NOTE: for larger S, keep energies lane-major as (B, S) per the perf review.
    energies = jnp.sum(tanh_e * v_row, axis=-1, keepdims=True)                # (B, S, 1)
    m = jnp.max(energies, axis=1, keepdims=True)                              # (B, 1, 1)
    p = jnp.exp(energies - m)
    attn = p / jnp.sum(p, axis=1, keepdims=True)                              # exact softmax
    context = jnp.sum(attn * enc3, axis=1)                                    # (B, H)

    # ---- one LSTM step from zero state (module calls lstm without carried state) ----
    wih = wih_ref[...]                                                        # (2H, 4H)
    gates = (jnp.dot(emb, wih[:H, :], preferred_element_type=jnp.float32)
             + jnp.dot(context, wih[H:, :], preferred_element_type=jnp.float32)
             + b_lstm)                                                        # (B, 4H)
    i_g = jax.nn.sigmoid(gates[:, 0:H])
    # forget gate multiplies c0 == 0 -> skipped (numerically identical)
    g_g = jnp.tanh(gates[:, 2 * H:3 * H])
    o_g = jax.nn.sigmoid(gates[:, 3 * H:4 * H])
    c_new = i_g * g_g
    h_new = o_g * jnp.tanh(c_new)                                             # (B, H)
    hnew_ref[...] = h_new            # carried to step t+1; final value written back once

    # TODO(synk): nn.Dropout applied as identity (eval semantics; train-mode PRNG mask omitted)

    # ---- output projection + log-softmax over vocab (lane-padded to Vp columns) ----
    logits = jnp.dot(h_new, wout_ref[...], preferred_element_type=jnp.float32) + b_out
    lm = jnp.max(logits, axis=-1, keepdims=True)
    z = logits - lm
    logp_ref[...] = (z - jnp.log(jnp.sum(jnp.exp(z), axis=-1, keepdims=True)))[None]


# ----------------------------------------------------------------------------- wrappers
def prepare_params(params):
    """One-time weight prep, hoisted out of the decode call."""
    V, H = params["embedding"].shape
    Vp = ((V + 127) // 128) * 128              # lane-dense output slab
    W = max(4 * H, Vp)
    pad_row = lambda x: jnp.pad(x, (0, W - x.shape[0]))
    b_out_p = jnp.pad(params["b_out"], (0, Vp - V), constant_values=-1e30)
    wout_p = jnp.pad(params["w_out"].T, ((0, 0), (0, Vp - V)))
    return {
        "embedding": params["embedding"].reshape(V, 1, H),     # (V, 1, H) for dynamic row gather
        "wa": params["w_attn"].T,                              # (2H, H)  [hidden-part ; enc-part]
        "wih_t": params["w_ih"].T,                             # (2H, 4H) [emb-part ; ctx-part]
        "wout_t": wout_p,                                      # (H, Vp)
        "vecs": jnp.stack([pad_row(params["b_attn"]),
                           pad_row(params["b_ih"] + params["b_hh"]),
                           pad_row(b_out_p),
                           pad_row(params["v"])]),             # (4, max(4H, Vp))
    }


@partial(jax.jit, static_argnames=("V",))
def decoder_attn_decode(prep, tokens, hidden, encoder_outputs, *, V):
    """Fused T-step (teacher-forced) decode. tokens: (B, T) int32; hidden: (1, B, H)."""
    B, S, H = encoder_outputs.shape
    T = tokens.shape[1]
    Vp = prep["wout_t"].shape[1]

    hflat = jnp.transpose(hidden, (1, 0, 2)).reshape(B, H)     # (B, H), num_layers == 1
    tok_flat = tokens.T.reshape(-1).astype(jnp.int32)          # (T*B,), t-major

    grid_spec = pltpu.PrefetchScalarGridSpec(
        num_scalar_prefetch=1,
        grid=(T,),
        in_specs=[
            pl.BlockSpec((prep["embedding"].shape[0], 1, H), lambda t, tok: (0, 0, 0)),
            pl.BlockSpec((B, H), lambda t, tok: (0, 0)),
            pl.BlockSpec((B, S, H), lambda t, tok: (0, 0, 0)),
            pl.BlockSpec(prep["wa"].shape, lambda t, tok: (0, 0)),
            pl.BlockSpec(prep["wih_t"].shape, lambda t, tok: (0, 0)),
            pl.BlockSpec(prep["wout_t"].shape, lambda t, tok: (0, 0)),
            pl.BlockSpec(prep["vecs"].shape, lambda t, tok: (0, 0)),
        ],
        out_specs=(
            pl.BlockSpec((1, B, Vp), lambda t, tok: (t, 0, 0)),   # per-step log-probs
            pl.BlockSpec((B, H), lambda t, tok: (0, 0)),          # resident hidden carry
        ),
        scratch_shapes=[pltpu.VMEM((B, S, H), jnp.float32)],       # enc @ Wa_e + b_attn
    )

    logp_pad, hnew = pl.pallas_call(
        decoder_attn_kernel,
        grid_spec=grid_spec,
        out_shape=(jax.ShapeDtypeStruct((T, B, Vp), jnp.float32),
                   jax.ShapeDtypeStruct((B, H), jnp.float32)),
        compiler_params=pltpu.CompilerParams(dimension_semantics=("arbitrary",)),
    )(tok_flat, prep["embedding"], hflat, encoder_outputs,
      prep["wa"], prep["wih_t"], prep["wout_t"], prep["vecs"])

    logp = jnp.transpose(logp_pad[:, :, :V], (1, 0, 2))        # (B, T, V)
    return logp, hnew[None, :, :]                              # hidden: (1, B, H)


# ----------------------------------------------------------------------------- reference
def decoder_attn_reference(params, input_seq, hidden, encoder_outputs):
    """Pure-JAX port of the PyTorch DecoderAttn.forward (single step)."""
    B, S, H = encoder_outputs.shape
    emb = params["embedding"][input_seq[:, 0]][:, None, :]                        # (B,1,H)
    hflat = jnp.transpose(hidden, (1, 0, 2)).reshape(B, -1)                       # (B,H)
    cat = jnp.concatenate(
        [jnp.repeat(hflat[:, None, :], S, axis=1), encoder_outputs], axis=2)      # (B,S,2H)
    energies = jnp.sum(
        params["v"] * jnp.tanh(cat @ params["w_attn"].T + params["b_attn"]), axis=2)
    attn = jax.nn.softmax(energies, axis=1)[:, None, :]                           # (B,1,S)
    context = attn @ encoder_outputs                                              # (B,1,H)
    rnn_in = jnp.concatenate([emb, context], axis=2)[:, 0, :]                     # (B,2H)
    gates = rnn_in @ params["w_ih"].T + params["b_ih"] + params["b_hh"]
    i, f, g, o = jnp.split(gates, 4, axis=1)
    c = jax.nn.sigmoid(i) * jnp.tanh(g)
    h = jax.nn.sigmoid(o) * jnp.tanh(c)
    logits = h @ params["w_out"].T + params["b_out"]
    logp = jax.nn.log_softmax(logits, axis=1)
    return logp[:, None, :], h[None, :, :]


# ----------------------------------------------------------------------------- main
if __name__ == "__main__":
    B, S, H, V, T = 2, 8, 32, 16, 6   # batch, enc seq len, hidden_size, output_size, decode steps

    key = jax.random.PRNGKey(0)
    keys = jax.random.split(key, 12)

    def u(k, shape, scale):
        return jax.random.uniform(k, shape, jnp.float32, -scale, scale)

    params = {
        "embedding": jax.random.normal(keys[0], (V, H), jnp.float32) * 0.1,
        "w_attn":    u(keys[1], (H, 2 * H), (2 * H) ** -0.5),
        "b_attn":    u(keys[2], (H,), (2 * H) ** -0.5),
        "v":         jax.random.uniform(keys[3], (H,), jnp.float32),   # torch.rand
        "w_ih":      u(keys[4], (4 * H, 2 * H), H ** -0.5),
        "w_hh":      u(keys[5], (4 * H, H), H ** -0.5),                # unused (h0 == 0)
        "b_ih":      u(keys[6], (4 * H,), H ** -0.5),
        "b_hh":      u(keys[7], (4 * H,), H ** -0.5),
        "w_out":     u(keys[8], (V, H), H ** -0.5),
        "b_out":     u(keys[9], (V,), H ** -0.5),
    }

    tokens = jax.random.randint(keys[10], (B, T), 0, V, dtype=jnp.int32)
    hidden0 = jax.random.normal(keys[11], (1, B, H), jnp.float32) * 0.5
    enc_out = jax.random.normal(jax.random.fold_in(key, 99), (B, S, H), jnp.float32) * 0.5

    prep = prepare_params(params)                       # one-time weight prep

    # ---- fused T-step decode (one pallas_call, weights resident across all steps) ----
    logp, hid = decoder_attn_decode(prep, tokens, hidden0, enc_out, V=V)
    jax.block_until_ready((logp, hid))
    assert logp.shape == (B, T, V) and hid.shape == (1, B, H)

    # reference: Python loop of the single-step module forward, hidden fed back each step
    with jax.default_matmul_precision("highest"):
        h_ref = hidden0
        ref_steps = []
        for t in range(T):
            o_t, h_ref = decoder_attn_reference(params, tokens[:, t:t + 1], h_ref, enc_out)
            ref_steps.append(o_t)
        ref_logp = jnp.concatenate(ref_steps, axis=1)
        ref_hid = h_ref
    # slightly looser than single-step: f32 rounding accumulates over T chained steps
    assert jnp.allclose(logp, ref_logp, atol=2e-5, rtol=2e-5), \
        float(jnp.max(jnp.abs(logp - ref_logp)))
    assert jnp.allclose(hid, ref_hid, atol=2e-5, rtol=2e-5), \
        float(jnp.max(jnp.abs(hid - ref_hid)))

    # ---- single-step parity with the original module forward (T == 1) ----
    out1, hid1 = decoder_attn_decode(prep, tokens[:, :1], hidden0, enc_out, V=V)
    jax.block_until_ready((out1, hid1))
    with jax.default_matmul_precision("highest"):
        ref1, refh1 = decoder_attn_reference(params, tokens[:, :1], hidden0, enc_out)
    assert out1.shape == (B, 1, V) and hid1.shape == (1, B, H)
    assert jnp.allclose(out1, ref1, atol=1e-5, rtol=1e-5), \
        float(jnp.max(jnp.abs(out1 - ref1)))
    assert jnp.allclose(hid1, refh1, atol=1e-5, rtol=1e-5), \
        float(jnp.max(jnp.abs(hid1 - refh1)))

    print("KERNEL_OK")
</pallas_src>

<mosaic_0001>
module attributes {stable_mosaic.version = 11 : i64} {
  func.func @decoder_attn_kernel(%arg0: i32, %arg1: memref<12xi32, #tpu.memory_space<smem>>, %arg2: memref<16x1x32xf32, #tpu.memory_space<vmem>>, %arg3: memref<2x32xf32, #tpu.memory_space<vmem>>, %arg4: memref<2x8x32xf32, #tpu.memory_space<vmem>>, %arg5: memref<64x32xf32, #tpu.memory_space<vmem>>, %arg6: memref<64x128xf32, #tpu.memory_space<vmem>>, %arg7: memref<32x128xf32, #tpu.memory_space<vmem>>, %arg8: memref<4x128xf32, #tpu.memory_space<vmem>>, %arg9: memref<1x2x128xf32, #tpu.memory_space<vmem>>, %arg10: memref<2x32xf32, #tpu.memory_space<vmem>>, %arg11: memref<2x8x32xf32, #tpu.memory_space<vmem>>) attributes {dimension_semantics = [#tpu.dimension_semantics<arbitrary>], iteration_bounds = array<i64: 6>, scalar_prefetch = 1 : i64, scratch_operands = 1 : i64, tpu.core_type = #tpu.core_type<tc>, window_params = [{pipeline_mode = #tpu.pipeline_mode<synchronous>, transform_indices = @transform_0, window_bounds = array<i64: 16, 1, 32>}, {pipeline_mode = #tpu.pipeline_mode<synchronous>, transform_indices = @transform_1, window_bounds = array<i64: 2, 32>}, {pipeline_mode = #tpu.pipeline_mode<synchronous>, transform_indices = @transform_2, window_bounds = array<i64: 2, 8, 32>}, {pipeline_mode = #tpu.pipeline_mode<synchronous>, transform_indices = @transform_3, window_bounds = array<i64: 64, 32>}, {pipeline_mode = #tpu.pipeline_mode<synchronous>, transform_indices = @transform_4, window_bounds = array<i64: 64, 128>}, {pipeline_mode = #tpu.pipeline_mode<synchronous>, transform_indices = @transform_5, window_bounds = array<i64: 32, 128>}, {pipeline_mode = #tpu.pipeline_mode<synchronous>, transform_indices = @transform_6, window_bounds = array<i64: 4, 128>}, {transform_indices = @transform_7, window_bounds = array<i64: 1, 2, 128>}, {pipeline_mode = #tpu.pipeline_mode<synchronous>, transform_indices = @transform_8, window_bounds = array<i64: 2, 32>}]} {
    %c0 = arith.constant 0 : index
    %c0_0 = arith.constant 0 : index
    %c0_1 = arith.constant 0 : index
    %0 = vector.load %arg4[%c0, %c0_0, %c0_1] : memref<2x8x32xf32, #tpu.memory_space<vmem>>, vector<2x8x32xf32>
    %c0_2 = arith.constant 0 : index
    %c0_3 = arith.constant 0 : index
    %1 = vector.load %arg5[%c0_2, %c0_3] : memref<64x32xf32, #tpu.memory_space<vmem>>, vector<64x32xf32>
    %c0_4 = arith.constant 0 : index
    %c0_5 = arith.constant 0 : index
    %2 = vector.load %arg8[%c0_4, %c0_5] : memref<4x128xf32, #tpu.memory_space<vmem>>, vector<4x128xf32>
    %3 = vector.extract_strided_slice %2 {offsets = [0, 0], sizes = [1, 32], strides = [1, 1]} : vector<4x128xf32> to vector<1x32xf32>
    %4 = vector.extract_strided_slice %2 {offsets = [1, 0], sizes = [1, 128], strides = [1, 1]} : vector<4x128xf32> to vector<1x128xf32>
    %5 = vector.extract_strided_slice %2 {offsets = [2, 0], sizes = [1, 128], strides = [1, 1]} : vector<4x128xf32> to vector<1x128xf32>
    %6 = vector.extract_strided_slice %2 {offsets = [3, 0], sizes = [1, 32], strides = [1, 1]} : vector<4x128xf32> to vector<1x32xf32>
    %c0_i32 = arith.constant 0 : i32
    %7 = arith.cmpi eq, %arg0, %c0_i32 : i32
    %8 = arith.extui %7 : i1 to i32
    %c0_i32_6 = arith.constant 0 : i32
    %9 = arith.cmpi ne, %8, %c0_i32_6 : i32
    scf.if %9 {
      %92 = vector.shape_cast %0 : vector<2x8x32xf32> to vector<16x32xf32>
      %93 = vector.extract_strided_slice %1 {offsets = [32, 0], sizes = [32, 32], strides = [1, 1]} : vector<64x32xf32> to vector<32x32xf32>
      %cst_38 = arith.constant dense<0.000000e+00> : vector<16x32xf32>
      %94 = tpu.matmul %92, %93, %cst_38 {dimension_numbers = #tpu.dot_dimension_numbers<[1], [0], [0], [1], [0, 0, 1, 1], [], []>} : vector<16x32xf32>, vector<32x32xf32>, vector<16x32xf32> -> vector<16x32xf32>
      %95 = vector.shape_cast %94 : vector<16x32xf32> to vector<2x8x32xf32>
      %96 = vector.shape_cast %3 : vector<1x32xf32> to vector<1x1x32xf32>
      %97 = vector.broadcast %96 : vector<1x1x32xf32> to vector<2x8x32xf32>
      %98 = arith.addf %95, %97 : vector<2x8x32xf32>
      %c0_39 = arith.constant 0 : index
      %c0_40 = arith.constant 0 : index
      %c0_41 = arith.constant 0 : index
      %99 = vector.load %arg11[%c0_39, %c0_40, %c0_41] : memref<2x8x32xf32, #tpu.memory_space<vmem>>, vector<2x8x32xf32>
      tpu.vector_store %arg11[%c0_39, %c0_40, %c0_41], %98 {strides = array<i32>} : memref<2x8x32xf32, #tpu.memory_space<vmem>>, vector<2x8x32xf32>,
      %c0_42 = arith.constant 0 : index
      %c0_43 = arith.constant 0 : index
      %100 = vector.load %arg3[%c0_42, %c0_43] : memref<2x32xf32, #tpu.memory_space<vmem>>, vector<2x32xf32>
      %c0_44 = arith.constant 0 : index
      %c0_45 = arith.constant 0 : index
      %101 = vector.load %arg10[%c0_44, %c0_45] : memref<2x32xf32, #tpu.memory_space<vmem>>, vector<2x32xf32>
      tpu.vector_store %arg10[%c0_44, %c0_45], %100 {strides = array<i32>} : memref<2x32xf32, #tpu.memory_space<vmem>>, vector<2x32xf32>,
    } else {
    }
    %c0_7 = arith.constant 0 : index
    %c0_8 = arith.constant 0 : index
    %10 = vector.load %arg10[%c0_7, %c0_8] : memref<2x32xf32, #tpu.memory_space<vmem>>, vector<2x32xf32>
    %c2_i32 = arith.constant 2 : i32
    %11 = arith.muli %arg0, %c2_i32 : i32
    %c0_i32_9 = arith.constant 0 : i32
    %12 = arith.addi %11, %c0_i32_9 : i32
    %13 = arith.index_cast %12 : i32 to index
    %14 = memref.load %arg1[%13] : memref<12xi32, #tpu.memory_space<smem>>
    %15 = arith.index_cast %14 : i32 to index
    %c0_10 = arith.constant 0 : index
    %c0_11 = arith.constant 0 : index
    %16 = vector.load %arg2[%15, %c0_10, %c0_11] : memref<16x1x32xf32, #tpu.memory_space<vmem>>, vector<1x1x32xf32>
    %17 = vector.shape_cast %16 : vector<1x1x32xf32> to vector<1x32xf32>
    %c2_i32_12 = arith.constant 2 : i32
    %18 = arith.muli %arg0, %c2_i32_12 : i32
    %c1_i32 = arith.constant 1 : i32
    %19 = arith.addi %18, %c1_i32 : i32
    %20 = arith.index_cast %19 : i32 to index
    %21 = memref.load %arg1[%20] : memref<12xi32, #tpu.memory_space<smem>>
    %22 = arith.index_cast %21 : i32 to index
    %c0_13 = arith.constant 0 : index
    %c0_14 = arith.constant 0 : index
    %23 = vector.load %arg2[%22, %c0_13, %c0_14] : memref<16x1x32xf32, #tpu.memory_space<vmem>>, vector<1x1x32xf32>
    %24 = vector.shape_cast %23 : vector<1x1x32xf32> to vector<1x32xf32>
    %25 = tpu.concatenate %17, %24 in 0 : vector<1x32xf32>, vector<1x32xf32> -> vector<2x32xf32>
    %26 = vector.extract_strided_slice %1 {offsets = [0, 0], sizes = [32, 32], strides = [1, 1]} : vector<64x32xf32> to vector<32x32xf32>
    %cst = arith.constant dense<0.000000e+00> : vector<2x32xf32>
    %27 = tpu.matmul %10, %26, %cst {dimension_numbers = #tpu.dot_dimension_numbers<[1], [0], [0], [1], [0, 0, 1, 1], [], []>} : vector<2x32xf32>, vector<32x32xf32>, vector<2x32xf32> -> vector<2x32xf32>
    %c0_15 = arith.constant 0 : index
    %c0_16 = arith.constant 0 : index
    %c0_17 = arith.constant 0 : index
    %28 = vector.load %arg11[%c0_15, %c0_16, %c0_17] : memref<2x8x32xf32, #tpu.memory_space<vmem>>, vector<2x8x32xf32>
    %29 = vector.shape_cast %27 : vector<2x32xf32> to vector<2x1x32xf32>
    %30 = vector.broadcast %29 : vector<2x1x32xf32> to vector<2x8x32xf32>
    %31 = arith.addf %28, %30 : vector<2x8x32xf32>
    %32 = math.tanh %31 : vector<2x8x32xf32>
    %33 = vector.shape_cast %6 : vector<1x32xf32> to vector<1x1x32xf32>
    %34 = vector.broadcast %33 : vector<1x1x32xf32> to vector<2x8x32xf32>
    %35 = arith.mulf %32, %34 : vector<2x8x32xf32>
    %cst_18 = arith.constant dense<0.000000e+00> : vector<2x8xf32>
    %36 = vector.multi_reduction <add>, %35, %cst_18 [2] : vector<2x8x32xf32> to vector<2x8xf32>
    %37 = vector.shape_cast %36 : vector<2x8xf32> to vector<2x8x1xf32>
    %cst_19 = arith.constant dense<0xFF800000> : vector<2x1xf32>
    %38 = vector.multi_reduction <maximumf>, %37, %cst_19 [1] : vector<2x8x1xf32> to vector<2x1xf32>
    %39 = vector.shape_cast %38 : vector<2x1xf32> to vector<2x1x1xf32>
    %40 = vector.broadcast %39 : vector<2x1x1xf32> to vector<2x8x1xf32>
    %41 = arith.subf %37, %40 : vector<2x8x1xf32>
    %42 = math.exp %41 : vector<2x8x1xf32>
    %cst_20 = arith.constant dense<0.000000e+00> : vector<2x1xf32>
    %43 = vector.multi_reduction <add>, %42, %cst_20 [1] : vector<2x8x1xf32> to vector<2x1xf32>
    %44 = vector.shape_cast %43 : vector<2x1xf32> to vector<2x1x1xf32>
    %45 = vector.broadcast %44 : vector<2x1x1xf32> to vector<2x8x1xf32>
    %46 = arith.divf %42, %45 : vector<2x8x1xf32>
    %47 = vector.broadcast %46 : vector<2x8x1xf32> to vector<2x8x32xf32>
    %48 = arith.mulf %47, %0 : vector<2x8x32xf32>
    %cst_21 = arith.constant dense<0.000000e+00> : vector<2x32xf32>
    %49 = vector.multi_reduction <add>, %48, %cst_21 [1] : vector<2x8x32xf32> to vector<2x32xf32>
    %c0_22 = arith.constant 0 : index
    %c0_23 = arith.constant 0 : index
    %50 = vector.load %arg6[%c0_22, %c0_23] : memref<64x128xf32, #tpu.memory_space<vmem>>, vector<64x128xf32>
    %51 = vector.extract_strided_slice %50 {offsets = [0, 0], sizes = [32, 128], strides = [1, 1]} : vector<64x128xf32> to vector<32x128xf32>
    %cst_24 = arith.constant dense<0.000000e+00> : vector<2x128xf32>
    %52 = tpu.matmul %25, %51, %cst_24 {dimension_numbers = #tpu.dot_dimension_numbers<[1], [0], [0], [1], [0, 0, 1, 1], [], []>} : vector<2x32xf32>, vector<32x128xf32>, vector<2x128xf32> -> vector<2x128xf32>
    %53 = vector.extract_strided_slice %50 {offsets = [32, 0], sizes = [32, 128], strides = [1, 1]} : vector<64x128xf32> to vector<32x128xf32>
    %cst_25 = arith.constant dense<0.000000e+00> : vector<2x128xf32>
    %54 = tpu.matmul %49, %53, %cst_25 {dimension_numbers = #tpu.dot_dimension_numbers<[1], [0], [0], [1], [0, 0, 1, 1], [], []>} : vector<2x32xf32>, vector<32x128xf32>, vector<2x128xf32> -> vector<2x128xf32>
    %55 = arith.addf %52, %54 : vector<2x128xf32>
    %56 = vector.broadcast %4 : vector<1x128xf32> to vector<2x128xf32>
    %57 = arith.addf %55, %56 : vector<2x128xf32>
    %58 = vector.extract_strided_slice %57 {offsets = [0, 0], sizes = [2, 32], strides = [1, 1]} : vector<2x128xf32> to vector<2x32xf32>
    %59 = arith.negf %58 : vector<2x32xf32>
    %60 = math.exp %59 : vector<2x32xf32>
    %cst_26 = arith.constant 1.000000e+00 : f32
    %61 = vector.broadcast %cst_26 : f32 to vector<2x32xf32>
    %62 = arith.addf %61, %60 : vector<2x32xf32>
    %63 = arith.divf %61, %62 : vector<2x32xf32>
    %64 = vector.extract_strided_slice %57 {offsets = [0, 64], sizes = [2, 32], strides = [1, 1]} : vector<2x128xf32> to vector<2x32xf32>
    %65 = math.tanh %64 : vector<2x32xf32>
    %66 = vector.extract_strided_slice %57 {offsets = [0, 96], sizes = [2, 32], strides = [1, 1]} : vector<2x128xf32> to vector<2x32xf32>
    %67 = arith.negf %66 : vector<2x32xf32>
    %68 = math.exp %67 : vector<2x32xf32>
    %cst_27 = arith.constant 1.000000e+00 : f32
    %69 = vector.broadcast %cst_27 : f32 to vector<2x32xf32>
    %70 = arith.addf %69, %68 : vector<2x32xf32>
    %71 = arith.divf %69, %70 : vector<2x32xf32>
    %72 = arith.mulf %63, %65 : vector<2x32xf32>
    %73 = math.tanh %72 : vector<2x32xf32>
    %74 = arith.mulf %71, %73 : vector<2x32xf32>
    %c0_28 = arith.constant 0 : index
    %c0_29 = arith.constant 0 : index
    %75 = vector.load %arg10[%c0_28, %c0_29] : memref<2x32xf32, #tpu.memory_space<vmem>>, vector<2x32xf32>
    tpu.vector_store %arg10[%c0_28, %c0_29], %74 {strides = array<i32>} : memref<2x32xf32, #tpu.memory_space<vmem>>, vector<2x32xf32>,
    %c0_30 = arith.constant 0 : index
    %c0_31 = arith.constant 0 : index
    %76 = vector.load %arg7[%c0_30, %c0_31] : memref<32x128xf32, #tpu.memory_space<vmem>>, vector<32x128xf32>
    %cst_32 = arith.constant dense<0.000000e+00> : vector<2x128xf32>
    %77 = tpu.matmul %74, %76, %cst_32 {dimension_numbers = #tpu.dot_dimension_numbers<[1], [0], [0], [1], [0, 0, 1, 1], [], []>} : vector<2x32xf32>, vector<32x128xf32>, vector<2x128xf32> -> vector<2x128xf32>
    %78 = vector.broadcast %5 : vector<1x128xf32> to vector<2x128xf32>
    %79 = arith.addf %77, %78 : vector<2x128xf32>
    %cst_33 = arith.constant dense<0xFF800000> : vector<2xf32>
    %80 = vector.multi_reduction <maximumf>, %79, %cst_33 [1] : vector<2x128xf32> to vector<2xf32>
    %81 = vector.shape_cast %80 : vector<2xf32> to vector<2x1xf32>
    %82 = vector.broadcast %81 : vector<2x1xf32> to vector<2x128xf32>
    %83 = arith.subf %79, %82 : vector<2x128xf32>
    %84 = math.exp %83 : vector<2x128xf32>
    %cst_34 = arith.constant dense<0.000000e+00> : vector<2xf32>
    %85 = vector.multi_reduction <add>, %84, %cst_34 [1] : vector<2x128xf32> to vector<2xf32>
    %86 = vector.shape_cast %85 : vector<2xf32> to vector<2x1xf32>
    %87 = math.log %86 : vector<2x1xf32>
    %88 = vector.broadcast %87 : vector<2x1xf32> to vector<2x128xf32>
    %89 = arith.subf %83, %88 : vector<2x128xf32>
    %90 = vector.shape_cast %89 : vector<2x128xf32> to vector<1x2x128xf32>
    %c0_35 = arith.constant 0 : index
    %c0_36 = arith.constant 0 : index
    %c0_37 = arith.constant 0 : index
    %91 = vector.load %arg9[%c0_35, %c0_36, %c0_37] : memref<1x2x128xf32, #tpu.memory_space<vmem>>, vector<1x2x128xf32>
    tpu.vector_store %arg9[%c0_35, %c0_36, %c0_37], %90 {strides = array<i32>} : memref<1x2x128xf32, #tpu.memory_space<vmem>>, vector<1x2x128xf32>,
    return
  }
  func.func @transform_0(%arg0: i32, %arg1: memref<12xi32, #tpu.memory_space<smem>>) -> (i32, i32, i32) {
    %c0_i32 = arith.constant 0 : i32
    %c0_i32_0 = arith.constant 0 : i32
    %c0_i32_1 = arith.constant 0 : i32
    %c0_i32_2 = arith.constant 0 : i32
    return %c0_i32, %c0_i32_0, %c0_i32_1 : i32, i32, i32
  }
  func.func @transform_1(%arg0: i32, %arg1: memref<12xi32, #tpu.memory_space<smem>>) -> (i32, i32) {
    %c0_i32 = arith.constant 0 : i32
    %c0_i32_0 = arith.constant 0 : i32
    %c0_i32_1 = arith.constant 0 : i32
    return %c0_i32, %c0_i32_0 : i32, i32
  }
  func.func @transform_2(%arg0: i32, %arg1: memref<12xi32, #tpu.memory_space<smem>>) -> (i32, i32, i32) {
    %c0_i32 = arith.constant 0 : i32
    %c0_i32_0 = arith.constant 0 : i32
    %c0_i32_1 = arith.constant 0 : i32
    %c0_i32_2 = arith.constant 0 : i32
    return %c0_i32, %c0_i32_0, %c0_i32_1 : i32, i32, i32
  }
  func.func @transform_3(%arg0: i32, %arg1: memref<12xi32, #tpu.memory_space<smem>>) -> (i32, i32) {
    %c0_i32 = arith.constant 0 : i32
    %c0_i32_0 = arith.constant 0 : i32
    %c0_i32_1 = arith.constant 0 : i32
    return %c0_i32, %c0_i32_0 : i32, i32
  }
  func.func @transform_4(%arg0: i32, %arg1: memref<12xi32, #tpu.memory_space<smem>>) -> (i32, i32) {
    %c0_i32 = arith.constant 0 : i32
    %c0_i32_0 = arith.constant 0 : i32
    %c0_i32_1 = arith.constant 0 : i32
    return %c0_i32, %c0_i32_0 : i32, i32
  }
  func.func @transform_5(%arg0: i32, %arg1: memref<12xi32, #tpu.memory_space<smem>>) -> (i32, i32) {
    %c0_i32 = arith.constant 0 : i32
    %c0_i32_0 = arith.constant 0 : i32
    %c0_i32_1 = arith.constant 0 : i32
    return %c0_i32, %c0_i32_0 : i32, i32
  }
  func.func @transform_6(%arg0: i32, %arg1: memref<12xi32, #tpu.memory_space<smem>>) -> (i32, i32) {
    %c0_i32 = arith.constant 0 : i32
    %c0_i32_0 = arith.constant 0 : i32
    %c0_i32_1 = arith.constant 0 : i32
    return %c0_i32, %c0_i32_0 : i32, i32
  }
  func.func @transform_7(%arg0: i32, %arg1: memref<12xi32, #tpu.memory_space<smem>>) -> (i32, i32, i32) {
    %c0_i32 = arith.constant 0 : i32
    %c0_i32_0 = arith.constant 0 : i32
    %c0_i32_1 = arith.constant 0 : i32
    return %arg0, %c0_i32, %c0_i32_0 : i32, i32, i32
  }
  func.func @transform_8(%arg0: i32, %arg1: memref<12xi32, #tpu.memory_space<smem>>) -> (i32, i32) {
    %c0_i32 = arith.constant 0 : i32
    %c0_i32_0 = arith.constant 0 : i32
    %c0_i32_1 = arith.constant 0 : i32
    return %c0_i32, %c0_i32_0 : i32, i32
  }
}

</mosaic_0001>

<llo_original>
// kernel: decoder_attn_decode.1
$region0: #{decoder_attn_decode.1}
  #allocation0 [shape = 'u32[]', space=smem, size = 0x4, offset = 0x4, fixed_abs, tag = 'smem constant byte address 0x4 - core index']
  #allocation1 [shape = 'u32[72,128]{1,0:T(1,128)}', space=vmem, size = 0x9000, scoped, tag = 'internal scratch']
  #allocation2 [shape = 'f32[2,8,32]{2,1,0:T(8,128)}', space=vmem, size = 0x2000, scoped, tag = 'scratch operand']
  #allocation3 [shape = 's32[1]{0}', space=sflag, size = 0x4, scoped, tag = 'scoped memory for decoder_attn_decode.1']
  #allocation4 [shape = 'u8[512]{0}', space=smem, size = 0x200, scoped, tag = 'prefetched SMEM operand 0']
  %s0 = inlined_call_operand.vmem [shape: s32[12], index: 0, kind: input, shape index: {}]
  %s1 = inlined_call_operand.vmem [shape: f32[16,1,32], index: 1, kind: input, shape index: {}]
  %s2 = inlined_call_operand.vmem [shape: f32[2,32], index: 2, kind: input, shape index: {}]
  %s3 = inlined_call_operand.hbm [shape: f32[2,8,32], index: 3, kind: input, shape index: {}]
  %s4 = inlined_call_operand.vmem [shape: f32[64,32], index: 4, kind: input, shape index: {}]
  %s5 = inlined_call_operand.vmem [shape: f32[64,128], index: 5, kind: input, shape index: {}]
  %s6 = inlined_call_operand.vmem [shape: f32[32,128], index: 6, kind: input, shape index: {}]
  %s7 = inlined_call_operand.vmem [shape: f32[4,128], index: 7, kind: input, shape index: {}]
  %s8 = inlined_call_operand.vmem [shape: f32[6,2,128], index: 8, kind: output, shape index: {0}]
  %s9 = inlined_call_operand.hbm [shape: f32[2,32], index: 9, kind: output, shape index: {1}]
  %10 = xla_tuple %s8, %s9
  %s11 = sld [smem:[#allocation0]]
  $region77: #{decoder_attn_decode.1} parent=0
    _
  %s13 = ssub.s32 1, %s11
  %s14 = scalar_select 0, %s13, %s11
  %s16 = sshll.u32 %s0, 4
  %s17 = int_to_ptr.vmem [resolvable:$true] %s16
  %19 = dma.vmem_to_smem %s17, 16, [#allocation4], [#allocation3]
  %21 = dma.done [#allocation3], 16
  %22 = sfence
  $region1: #{decoder_attn_decode.1} parent=0
    #allocation5 [shape = 'u8[8192]{0}', space=vmem, size = 0x2000, scoped, tag = 'input window, operand 3, single buffered']
    #allocation6 [shape = 's32[2]{0}', space=sflag, size = 0x8, scoped, tag = 'scoped memory for decoder_attn_decode.1']
    #allocation7 [shape = 's32[2]{0}', space=sflag, size = 0x8, scoped, tag = 'scoped memory for decoder_attn_decode.1']
    #allocation8 [shape = 'u8[1024]{0}', space=vmem, size = 0x400, scoped, tag = 'output window, operand 1, single buffered']
    %23 = vsyncpa [#allocation6], 0
    %24 = vsyncpa [#allocation7], 0
    loop: start=0, step=1, limit=8
    $region2: #{decoder_attn_decode.1} parent=1 // loop_pre_header
      _
    $region3: #{decoder_attn_decode.1} parent=1 // loop_header
      %s26 = sphi 0, %s30
      %p27 = scmp.ge.s32.totalorder %s26, 8
      %s34 = sphi 0, %s34
      %s36 = sphi 0, %s34
      %s37 = sphi 0, %s36
      %s51 = sphi 0, %s37
      %s55 = sphi 0, %s55
      %s57 = sphi 0, %s55
      %s58 = sphi 0, %s57
      %s72 = sphi 0, %s58
      %s76 = sphi 0, %s76
      %s78 = sphi 0, %s76
      %s79 = sphi 0, %s78
      %s93 = sphi 0, %s79
      %s97 = sphi 0, %s97
      %s99 = sphi 0, %s97
      %s100 = sphi 0, %s99
      %s114 = sphi 0, %s100
      %s118 = sphi 0, %s118
      %s120 = sphi 0, %s118
      %s121 = sphi 0, %s120
      %s135 = sphi 0, %s121
      %s139 = sphi 0, %s139
      %s141 = sphi 0, %s139
      %s142 = sphi 0, %s141
      %s156 = sphi 0, %s142
      %s160 = sphi 0, %s160
      %s162 = sphi 0, %s160
      %s163 = sphi 0, %s162
      %s177 = sphi 0, %s163
      %s183 = sphi 0, %s185
      %s186 = sphi 0, %s183
      %s187 = sphi 0, %s186
      %s203 = sphi 0, %s187
      %s207 = sphi 0, %s207
      %s209 = sphi 0, %s207
      %s210 = sphi 0, %s209
      %s224 = sphi 0, %s210
    $region4: #{decoder_attn_decode.1} parent=1 // loop_header_branch
      %29 = sbr.rel (%p27) target = $region8
    $region5: #{decoder_attn_decode.1} parent=1 // loop_body
      %s31 = ssub.s32 %s26, 1
      %s32 = ssub.s32 %s26, 2
      %s33 = sadd.s32 %s26, 1
      %s35 = sadd.s32 %s34, 1
      %p38 = scmp.eq.s32.totalorder %s26, 5
      %p39 = scmp.ne.s32.totalorder %s34, %s36
      %p40 = scmp.eq.s32.totalorder %s26, 0
      %p41 = por %p39, %p40
      %p42 = scmp.ne.s32.totalorder %s34, %s36
      %p43 = scmp.eq.s32.totalorder %s31, 5
      %p44 = por %p42, %p43
      %p45 = scmp.ne.s32.totalorder %s36, %s37
      %p46 = scmp.eq.s32.totalorder %s31, 0
      %p47 = por %p45, %p46
      %p48 = scmp.ne.s32.totalorder %s36, %s37
      %p49 = scmp.eq.s32.totalorder %s32, 5
      %p50 = por %p48, %p49
      %p52 = scmp.ne.s32.totalorder %s37, %s51
      %p53 = scmp.eq.s32.totalorder %s32, 0
      %p54 = por %p52, %p53
      %s56 = sadd.s32 %s55, 1
      %p59 = scmp.eq.s32.totalorder %s26, 5
      %p60 = scmp.ne.s32.totalorder %s55, %s57
      %p61 = scmp.eq.s32.totalorder %s26, 0
      %p62 = por %p60, %p61
      %p63 = scmp.ne.s32.totalorder %s55, %s57
      %p64 = scmp.eq.s32.totalorder %s31, 5
      %p65 = por %p63, %p64
      %p66 = scmp.ne.s32.totalorder %s57, %s58
      %p67 = scmp.eq.s32.totalorder %s31, 0
      %p68 = por %p66, %p67
      %p69 = scmp.ne.s32.totalorder %s57, %s58
      %p70 = scmp.eq.s32.totalorder %s32, 5
      %p71 = por %p69, %p70
      %p73 = scmp.ne.s32.totalorder %s58, %s72
      %p74 = scmp.eq.s32.totalorder %s32, 0
      %p75 = por %p73, %p74
      %s77 = sadd.s32 %s76, 1
      %p80 = scmp.eq.s32.totalorder %s26, 5
      %p81 = scmp.ne.s32.totalorder %s76, %s78
      %p82 = scmp.eq.s32.totalorder %s26, 0
      %p83 = por %p81, %p82
      %p84 = scmp.ne.s32.totalorder %s76, %s78
      %p85 = scmp.eq.s32.totalorder %s31, 5
      %p86 = por %p84, %p85
      %p87 = scmp.ne.s32.totalorder %s78, %s79
      %p88 = scmp.eq.s32.totalorder %s31, 0
      %p89 = por %p87, %p88
      %p90 = scmp.ne.s32.totalorder %s78, %s79
      %p91 = scmp.eq.s32.totalorder %s32, 5
      %p92 = por %p90, %p91
      %p94 = scmp.ne.s32.totalorder %s79, %s93
      %p95 = scmp.eq.s32.totalorder %s32, 0
      %p96 = por %p94, %p95
      %s98 = sadd.s32 %s97, 1
      %p101 = scmp.eq.s32.totalorder %s26, 5
      %p102 = scmp.ne.s32.totalorder %s97, %s99
      %p103 = scmp.eq.s32.totalorder %s26, 0
      %p104 = por %p102, %p103
      %p105 = scmp.ne.s32.totalorder %s97, %s99
      %p106 = scmp.eq.s32.totalorder %s31, 5
      %p107 = por %p105, %p106
      %p108 = scmp.ne.s32.totalorder %s99, %s100
      %p109 = scmp.eq.s32.totalorder %s31, 0
      %p110 = por %p108, %p109
      %p111 = scmp.ne.s32.totalorder %s99, %s100
      %p112 = scmp.eq.s32.totalorder %s32, 5
      %p113 = por %p111, %p112
      %p115 = scmp.ne.s32.totalorder %s100, %s114
      %p116 = scmp.eq.s32.totalorder %s32, 0
      %p117 = por %p115, %p116
      %s119 = sadd.s32 %s118, 1
      %p122 = scmp.eq.s32.totalorder %s26, 5
      %p123 = scmp.ne.s32.totalorder %s118, %s120
      %p124 = scmp.eq.s32.totalorder %s26, 0
      %p125 = por %p123, %p124
      %p126 = scmp.ne.s32.totalorder %s118, %s120
      %p127 = scmp.eq.s32.totalorder %s31, 5
      %p128 = por %p126, %p127
      %p129 = scmp.ne.s32.totalorder %s120, %s121
      %p130 = scmp.eq.s32.totalorder %s31, 0
      %p131 = por %p129, %p130
      %p132 = scmp.ne.s32.totalorder %s120, %s121
      %p133 = scmp.eq.s32.totalorder %s32, 5
      %p134 = por %p132, %p133
      %p136 = scmp.ne.s32.totalorder %s121, %s135
      %p137 = scmp.eq.s32.totalorder %s32, 0
      %p138 = por %p136, %p137
      %s140 = sadd.s32 %s139, 1
      %p143 = scmp.eq.s32.totalorder %s26, 5
      %p144 = scmp.ne.s32.totalorder %s139, %s141
      %p145 = scmp.eq.s32.totalorder %s26, 0
      %p146 = por %p144, %p145
      %p147 = scmp.ne.s32.totalorder %s139, %s141
      %p148 = scmp.eq.s32.totalorder %s31, 5
      %p149 = por %p147, %p148
      %p150 = scmp.ne.s32.totalorder %s141, %s142
      %p151 = scmp.eq.s32.totalorder %s31, 0
      %p152 = por %p150, %p151
      %p153 = scmp.ne.s32.totalorder %s141, %s142
      %p154 = scmp.eq.s32.totalorder %s32, 5
      %p155 = por %p153, %p154
      %p157 = scmp.ne.s32.totalorder %s142, %s156
      %p158 = scmp.eq.s32.totalorder %s32, 0
      %p159 = por %p157, %p158
      %s161 = sadd.s32 %s160, 1
      %p164 = scmp.eq.s32.totalorder %s26, 5
      %p165 = scmp.ne.s32.totalorder %s160, %s162
      %p166 = scmp.eq.s32.totalorder %s26, 0
      %p167 = por %p165, %p166
      %p168 = scmp.ne.s32.totalorder %s160, %s162
      %p169 = scmp.eq.s32.totalorder %s31, 5
      %p170 = por %p168, %p169
      %p171 = scmp.ne.s32.totalorder %s162, %s163
      %p172 = scmp.eq.s32.totalorder %s31, 0
      %p173 = por %p171, %p172
      %p174 = scmp.ne.s32.totalorder %s162, %s163
      %p175 = scmp.eq.s32.totalorder %s32, 5
      %p176 = por %p174, %p175
      %p178 = scmp.ne.s32.totalorder %s163, %s177
      %p179 = scmp.eq.s32.totalorder %s32, 0
      %p180 = por %p178, %p179
      %s181 = ssub.s32 %s26, %s33
      %p182 = scmp.eq.s32.totalorder %s181, 0
      %s184 = sadd.s32 %s183, 1
      %s185 = scalar_select %p182, %s183, %s184
      %p188 = pneg %p182
      %p189 = scmp.eq.s32.totalorder %s26, 5
      %p190 = por %p188, %p189
      %p191 = scmp.ne.s32.totalorder %s183, %s186
      %p192 = scmp.eq.s32.totalorder %s26, 0
      %p193 = por %p191, %p192
      %p194 = scmp.ne.s32.totalorder %s183, %s186
      %p195 = scmp.eq.s32.totalorder %s31, 5
      %p196 = por %p194, %p195
      %p197 = scmp.ne.s32.totalorder %s186, %s187
      %p198 = scmp.eq.s32.totalorder %s31, 0
      %p199 = por %p197, %p198
      %p200 = scmp.ne.s32.totalorder %s186, %s187
      %p201 = scmp.eq.s32.totalorder %s32, 5
      %p202 = por %p200, %p201
      %p204 = scmp.ne.s32.totalorder %s187, %s203
      %p205 = scmp.eq.s32.totalorder %s32, 0
      %p206 = por %p204, %p205
      %s208 = sadd.s32 %s207, 1
      %p211 = scmp.eq.s32.totalorder %s26, 5
      %p212 = scmp.ne.s32.totalorder %s207, %s209
      %p213 = scmp.eq.s32.totalorder %s26, 0
      %p214 = por %p212, %p213
      %p215 = scmp.ne.s32.totalorder %s207, %s209
      %p216 = scmp.eq.s32.totalorder %s31, 5
      %p217 = por %p215, %p216
      %p218 = scmp.ne.s32.totalorder %s209, %s210
      %p219 = scmp.eq.s32.totalorder %s31, 0
      %p220 = por %p218, %p219
      %p221 = scmp.ne.s32.totalorder %s209, %s210
      %p222 = scmp.eq.s32.totalorder %s32, 5
      %p223 = por %p221, %p222
      %p225 = scmp.ne.s32.totalorder %s210, %s224
      %p226 = scmp.eq.s32.totalorder %s32, 0
      %p227 = por %p225, %p226
      %p228 = scmp.le.s32.totalorder 1, %s26
      %p229 = scmp.lt.s32.totalorder %s26, 7
      %p230 = pnand %p228, %p229
      %p231 = pneg %p230
      // Predicated region
      $region9: #{decoder_attn_decode.1} parent=5 // pred_check
        _
      $region10: #{decoder_attn_decode.1} parent=5 // pred_check_branch
        %233 = sbr.rel (%p230) target = $region12
      $region11: #{decoder_attn_decode.1} parent=5 // pred_region
        %s234 = ssub.s32 %s26, 1
        // Predicated region
        $region13: #{decoder_attn_decode.1} parent=11 // pred_check
          %p235 = pneg %p47
        $region14: #{decoder_attn_decode.1} parent=11 // pred_check_branch
          %237 = sbr.rel (%p235) target = $region16
        $region15: #{decoder_attn_decode.1} parent=11 // pred_region
          _
        $region16: #{decoder_attn_decode.1} parent=11 // pred_fallthru
          _
        // Predicated region
        $region17: #{decoder_attn_decode.1} parent=11 // pred_check
          %p238 = pneg %p68
        $region18: #{decoder_attn_decode.1} parent=11 // pred_check_branch
          %240 = sbr.rel (%p238) target = $region20
        $region19: #{decoder_attn_decode.1} parent=11 // pred_region
          _
        $region20: #{decoder_attn_decode.1} parent=11 // pred_fallthru
          _
        // Predicated region
        $region21: #{decoder_attn_decode.1} parent=11 // pred_check
          %p241 = pneg %p89
        $region22: #{decoder_attn_decode.1} parent=11 // pred_check_branch
          %243 = sbr.rel (%p241) target = $region24
        $region23: #{decoder_attn_decode.1} parent=11 // pred_region
          %245 = vsyncadd [#allocation6], 0
          %s246 = sshll.u32 %s3, 4
          %s247 = int_to_ptr.hbm [resolvable:$true] %s246
          %s248 = sshll.u32 [#allocation5], 4
          %s249 = int_to_ptr.vmem [resolvable:$true] %s248
          %254 = dma.hbm_to_vmem [thread:$0]  %s247, 256, %s249, [#allocation6], 128, 128, 8
        $region24: #{decoder_attn_decode.1} parent=11 // pred_fallthru
          _
        // Predicated region
        $region25: #{decoder_attn_decode.1} parent=11 // pred_check
          %p255 = pneg %p110
        $region26: #{decoder_attn_decode.1} parent=11 // pred_check_branch
          %257 = sbr.rel (%p255) target = $region28
        $region27: #{decoder_attn_decode.1} parent=11 // pred_region
          _
        $region28: #{decoder_attn_decode.1} parent=11 // pred_fallthru
          _
        // Predicated region
        $region29: #{decoder_attn_decode.1} parent=11 // pred_check
          %p258 = pneg %p131
        $region30: #{decoder_attn_decode.1} parent=11 // pred_check_branch
          %260 = sbr.rel (%p258) target = $region32
        $region31: #{decoder_attn_decode.1} parent=11 // pred_region
          _
        $region32: #{decoder_attn_decode.1} parent=11 // pred_fallthru
          _
        // Predicated region
        $region33: #{decoder_attn_decode.1} parent=11 // pred_check
          %p261 = pneg %p152
        $region34: #{decoder_attn_decode.1} parent=11 // pred_check_branch
          %263 = sbr.rel (%p261) target = $region36
        $region35: #{decoder_attn_decode.1} parent=11 // pred_region
          _
        $region36: #{decoder_attn_decode.1} parent=11 // pred_fallthru
          _
        // Predicated region
        $region37: #{decoder_attn_decode.1} parent=11 // pred_check
          %p264 = pneg %p173
        $region38: #{decoder_attn_decode.1} parent=11 // pred_check_branch
          %266 = sbr.rel (%p264) target = $region40
        $region39: #{decoder_attn_decode.1} parent=11 // pred_region
          _
        $region40: #{decoder_attn_decode.1} parent=11 // pred_fallthru
          _
      $region12: #{decoder_attn_decode.1} parent=5 // pred_fallthru
        _
      %p267 = scmp.lt.s32.totalorder %s26, 6
      // Predicated region
      $region41: #{decoder_attn_decode.1} parent=5 // pred_check
        %p268 = pneg %p267
      $region42: #{decoder_attn_decode.1} parent=5 // pred_check_branch
        %270 = sbr.rel (%p268) target = $region44
      $region43: #{decoder_attn_decode.1} parent=5 // pred_region
        _
      $region44: #{decoder_attn_decode.1} parent=5 // pred_fallthru
        _
      %p271 = scmp.le.s32.totalorder 1, %s26
      %p272 = scmp.lt.s32.totalorder %s26, 7
      %p273 = pnand %p271, %p272
      %p274 = pneg %p273
      // Predicated region
      $region45: #{decoder_attn_decode.1} parent=5 // pred_check
        _
      $region46: #{decoder_attn_decode.1} parent=5 // pred_check_branch
        %276 = sbr.rel (%p273) target = $region48
      $region47: #{decoder_attn_decode.1} parent=5 // pred_region
        %s277 = ssub.s32 %s26, 1
        // Predicated region
        $region49: #{decoder_attn_decode.1} parent=47 // pred_check
          %p278 = pneg %p89
        $region50: #{decoder_attn_decode.1} parent=47 // pred_check_branch
          %280 = sbr.rel (%p278) target = $region52
        $region51: #{decoder_attn_decode.1} parent=47 // pred_region
          %282 = dma.done [#allocation6], 256
        $region52: #{decoder_attn_decode.1} parent=47 // pred_fallthru
          _
        %p283 = pneg %p47
        %p284 = pneg %p44
        %p285 = pneg %p68
        %p286 = pneg %p65
        %p287 = pneg %p89
        %p288 = pneg %p86
        %p289 = pneg %p110
        %p290 = pneg %p107
        %p291 = pneg %p131
        %p292 = pneg %p128
        %p293 = pneg %p152
        %p294 = pneg %p149
        %p295 = pneg %p173
        %p296 = pneg %p170
        %p297 = pneg %p199
        %p298 = pneg %p196
        %p299 = scmp.lt.s32.totalorder %s31, 5
        %s300 = scalar_select %p299, %s31, 5
        %s301 = smul.addr %s300, 2
        %s302 = scalar_lea.vmem %s8, %s301
        %p303 = pneg %p220
        %p304 = pneg %p217
        %p305 = scmp.lt.s32.totalorder %s31, 5
        %s306 = scalar_select %p305, %s31, 5
        %s307 = smul.addr %s306, 2
        %s308 = scalar_lea.vmem %s8, %s307
        %v309 = vld [vmem:[#allocation5] sm:$0xff]
        %v310 = vld [vmem:[#allocation5 + $0x8] sm:$0xff]
        %v311 = vld [vmem:[%s4] sm:$0xff]
        %v312 = vld [vmem:[%s4 + $0x8] sm:$0xff]
        %v313 = vld [vmem:[%s4 + $0x10] sm:$0xff]
        %v314 = vld [vmem:[%s4 + $0x18] sm:$0xff]
        %v315 = vld [vmem:[%s4 + $0x20] sm:$0xff]
        %v316 = vld [vmem:[%s4 + $0x28] sm:$0xff]
        %v317 = vld [vmem:[%s4 + $0x30] sm:$0xff]
        %v318 = vld [vmem:[%s4 + $0x38] sm:$0xff]
        %v319 = vld [vmem:[%s7] sm:$0xf]
        %p320 = scmp.eq.s32.totalorder %s31, 0
        // Predicated region
        $region53: #{decoder_attn_decode.1} parent=47 // pred_check
          %p321 = pneg %p320
        $region54: #{decoder_attn_decode.1} parent=47 // pred_check_branch
          %323 = sbr.rel (%p321) target = $region56
        $region55: #{decoder_attn_decode.1} parent=47 // pred_region
          %vm324 = vcmask 261120
          %v326 = vsel %vm324, %v309, 0
          %v329 = vsel %vm324, %v310, 0
          %331 = vmatpush.msra.mxu0 0.0
          %332 = vmatpush.msra.mxu0 0.0
          %333 = vmatpush.msra.mxu0 0.0
          %334 = vmatpush.msra.mxu0 0.0
          %335 = vmatpush.msra.mxu0 0.0
          %336 = vmatpush.msra.mxu0 0.0
          %337 = vmatpush.msra.mxu0 0.0
          %338 = vmatpush.msra.mxu0 0.0
          %339 = vmatpush.msra.mxu0 0.0
          %340 = vmatpush.msra.mxu0 0.0
          %341 = vmatpush.msra.mxu0 0.0
          %342 = vmatpush.msra.mxu0 0.0
          %343 = vmatpush.msra.mxu0 %v318
          %344 = vmatpush.msra.mxu0 %v317
          %345 = vmatpush.msra.mxu0 %v316
          %346 = vmatpush.msra.mxu0 %v315
          %347 = vmatmul.f32.gmra.mxu0 %v326
          %v348 = vpop.f32.mrf.mxu0
          %v349 = vadd.f32 0.0, %v348
          %350 = vmatmul.f32.gmra.mxu0 %v329
          %v351 = vpop.f32.mrf.mxu0
          %v352 = vadd.f32 0.0, %v351
          %353 = vdwg.mxu0
          %v354 = vperm.slane %v319, 0
          %v355 = vadd.f32 %v349, %v354
          %v356 = vadd.f32 %v352, %v354
          %357 = vst.msk [vmem:[#allocation2] sm:$0xff] %vm324, %v355
          %358 = vst.msk [vmem:[#allocation2 + $0x8] sm:$0xff] %vm324, %v356
          %v359 = vld [vmem:[%s2] sm:$0x3]
          %vm360 = vcmask 254976
          %361 = vst.msk [vmem:[#allocation8] sm:$0x3] %vm360, %v359
        $region56: #{decoder_attn_decode.1} parent=47 // pred_fallthru
          _
        %v362 = vld [vmem:[#allocation8] sm:$0x3]
        %s363 = smul.u32 %s31, 2
        %s364 = sld [smem:[#allocation4 + %s363]]
        %s365 = scalar_lea.vmem %s1, %s364
        %v366 = vld [vmem:[%s365] sm:$0x1]
        %s367 = sadd.s32 %s363, 1
        %s368 = sld [smem:[#allocation4 + %s367]]
        %s369 = scalar_lea.vmem %s1, %s368
        %v370 = vld [vmem:[%s369] sm:$0x1]
        %v372 = vperm.slane %v370, 0
        %vm374 = vcmask 1040384
        %v375 = vsel %vm374, %v366, %v372
        %vm376 = vcmask 261120
        %v378 = vsel %vm376, %v362, 0
        %380 = vmatpush.msra.mxu0 0.0
        %381 = vmatpush.msra.mxu0 0.0
        %382 = vmatpush.msra.mxu0 0.0
        %383 = vmatpush.msra.mxu0 0.0
        %384 = vmatpush.msra.mxu0 0.0
        %385 = vmatpush.msra.mxu0 0.0
        %386 = vmatpush.msra.mxu0 0.0
        %387 = vmatpush.msra.mxu0 0.0
        %388 = vmatpush.msra.mxu0 0.0
        %389 = vmatpush.msra.mxu0 0.0
        %390 = vmatpush.msra.mxu0 0.0
        %391 = vmatpush.msra.mxu0 0.0
        %392 = vmatpush.msra.mxu0 %v314
        %393 = vmatpush.msra.mxu0 %v313
        %394 = vmatpush.msra.mxu0 %v312
        %395 = vmatpush.msra.mxu0 %v311
        %396 = vmatmul.f32.gmra.mxu0 %v378
        %v397 = vpop.f32.mrf.mxu0
        %v398 = vadd.f32 0.0, %v397
        %399 = vdwg.mxu0
        %v400 = vld [vmem:[#allocation2] sm:$0xff]
        %v401 = vld [vmem:[#allocation2 + $0x8] sm:$0xff]
        %v403 = vrot.slane %v398, 1
        %v404 = vperm.slane %v398, 0
        %v405 = vperm.slane %v403, 0
        %v408 = vadd.f32 %v400, %v404
        %v409 = vadd.f32 %v401, %v405
        %v410 = vtanh.pop %v408
        %v411 = vtanh.pop %v409
        %v412 = vperm.slane %v319, 3
        %v413 = vmul.f32 %v410, %v412
        %v414 = vmul.f32 %v411, %v412
        %v415 = vsel %vm376, %v413, 0.0
        %416 = vadd.xlane.f32.xlu0 %v415
        %v417 = vpop.xlane.xlu0 %416
        %v418 = vsel %vm376, %v414, 0.0
        %419 = vadd.xlane.f32.xlu0 %v418
        %v420 = vpop.xlane.xlu0 %419
        %v421 = vrot.slane %v417, 4
        %v422 = vmax.f32 %v417, %v421
        %v423 = vrot.slane %v422, 2
        %v424 = vmax.f32 %v422, %v423
        %v425 = vrot.slane %v424, 1
        %v426 = vmax.f32 %v424, %v425
        %v427 = vrot.slane %v420, 4
        %v428 = vmax.f32 %v420, %v427
        %v429 = vrot.slane %v428, 2
        %v430 = vmax.f32 %v428, %v429
        %v431 = vrot.slane %v430, 1
        %v432 = vmax.f32 %v430, %v431
        %v433 = vsub.f32 %v417, %v426
        %v434 = vsub.f32 %v420, %v432
        %v435 = vmul.f32 %v433, 1.442695
        %v436 = vpow.pop %v435
        %v437 = vmul.f32 %v434, 1.442695
        %v438 = vpow.pop %v437
        %v439 = vrot.slane %v436, 4
        %v440 = vadd.f32 %v436, %v439
        %v441 = vrot.slane %v440, 2
        %v442 = vadd.f32 %v440, %v441
        %v443 = vrot.slane %v442, 1
        %v444 = vadd.f32 %v442, %v443
        %v445 = vrot.slane %v438, 4
        %v446 = vadd.f32 %v438, %v445
        %v447 = vrot.slane %v446, 2
        %v448 = vadd.f32 %v446, %v447
        %v449 = vrot.slane %v448, 1
        %v450 = vadd.f32 %v448, %v449
        %v451 = vrcp.pop %v444
        %v452 = vmul.f32 %v444, %v451
        %v453 = vsub.f32 1.0, %v452
        %v454 = vmul.f32 %v451, %v453
        %v455 = vadd.f32 %v451, %v454
        %vm456 = vweird.f32 %v444
        %vm457 = vweird.f32 %v451
        %vm458 = vmor %vm456, %vm457
        %v459 = vsel %vm458, %v451, %v455
        %v460 = vand.u32 2147483647, %v444
        %vm461 = vcmp.eq.f32.partialorder %v460, 8.507059e+37
        %v462 = vand.u32 %v444, 2147483648
        %v463 = vor.u32 1.1754944e-38, %v462
        %v464 = vsel %vm461, %v463, %v459
        %v465 = vmul.f32 %v436, %v464
        %v466 = vrcp.pop %v450
        %v467 = vmul.f32 %v450, %v466
        %v468 = vsub.f32 1.0, %v467
        %v469 = vmul.f32 %v466, %v468
        %v470 = vadd.f32 %v466, %v469
        %vm471 = vweird.f32 %v450
        %vm472 = vweird.f32 %v466
        %vm473 = vmor %vm471, %vm472
        %v474 = vsel %vm473, %v466, %v470
        %v475 = vand.u32 2147483647, %v450
        %vm476 = vcmp.eq.f32.partialorder %v475, 8.507059e+37
        %v477 = vand.u32 %v450, 2147483648
        %v478 = vor.u32 1.1754944e-38, %v477
        %v479 = vsel %vm476, %v478, %v474
        %v480 = vmul.f32 %v438, %v479
        %v481 = vmul.f32 %v465, %v309
        %v482 = vmul.f32 %v480, %v310
        %v483 = vsel %vm376, %v481, 0.0
        %v484 = vrot.slane %v483, 4
        %v485 = vadd.f32 %v483, %v484
        %v486 = vrot.slane %v485, 2
        %v487 = vadd.f32 %v485, %v486
        %v488 = vrot.slane %v487, 1
        %v489 = vadd.f32 %v487, %v488
        %v490 = vsel %vm376, %v482, 0.0
        %v491 = vrot.slane %v490, 4
        %v492 = vadd.f32 %v490, %v491
        %v493 = vrot.slane %v492, 2
        %v494 = vadd.f32 %v492, %v493
        %v495 = vrot.slane %v494, 1
        %v496 = vadd.f32 %v494, %v495
        %v497 = vld [vmem:[%s5] sm:$0xff]
        %v498 = vld [vmem:[%s5 + $0x8] sm:$0xff]
        %v499 = vld [vmem:[%s5 + $0x10] sm:$0xff]
        %v500 = vld [vmem:[%s5 + $0x18] sm:$0xff]
        %v501 = vld [vmem:[%s5 + $0x20] sm:$0xff]
        %v502 = vld [vmem:[%s5 + $0x28] sm:$0xff]
        %v503 = vld [vmem:[%s5 + $0x30] sm:$0xff]
        %v504 = vld [vmem:[%s5 + $0x38] sm:$0xff]
        %vm507 = vcmask 1041409
        %v508 = vsel %vm507, %v496, %v489
        %v509 = vsel %vm376, %v508, 0
        %511 = vmatpush.msra.mxu0 0.0
        %512 = vmatpush.msra.mxu0 0.0
        %513 = vmatpush.msra.mxu0 0.0
        %514 = vmatpush.msra.mxu0 0.0
        %515 = vmatpush.msra.mxu0 0.0
        %516 = vmatpush.msra.mxu0 0.0
        %517 = vmatpush.msra.mxu0 0.0
        %518 = vmatpush.msra.mxu0 0.0
        %519 = vmatpush.msra.mxu0 0.0
        %520 = vmatpush.msra.mxu0 0.0
        %521 = vmatpush.msra.mxu0 0.0
        %522 = vmatpush.msra.mxu0 0.0
        %523 = vmatpush.msra.mxu0 %v504
        %524 = vmatpush.msra.mxu0 %v503
        %525 = vmatpush.msra.mxu0 %v502
        %526 = vmatpush.msra.mxu0 %v501
        %527 = vmatmul.f32.gmra.mxu0 %v509
        %v528 = vpop.f32.mrf.mxu0
        %v529 = vadd.f32 0.0, %v528
        %530 = vdwg.mxu0
        %v532 = vsel %vm376, %v375, 0
        %534 = vmatpush.msra.mxu0 0.0
        %535 = vmatpush.msra.mxu0 0.0
        %536 = vmatpush.msra.mxu0 0.0
        %537 = vmatpush.msra.mxu0 0.0
        %538 = vmatpush.msra.mxu0 0.0
        %539 = vmatpush.msra.mxu0 0.0
        %540 = vmatpush.msra.mxu0 0.0
        %541 = vmatpush.msra.mxu0 0.0
        %542 = vmatpush.msra.mxu0 0.0
        %543 = vmatpush.msra.mxu0 0.0
        %544 = vmatpush.msra.mxu0 0.0
        %545 = vmatpush.msra.mxu0 0.0
        %546 = vmatpush.msra.mxu0 %v500
        %547 = vmatpush.msra.mxu0 %v499
        %548 = vmatpush.msra.mxu0 %v498
        %549 = vmatpush.msra.mxu0 %v497
        %550 = vmatmul.f32.gmra.mxu0 %v532
        %v551 = vpop.f32.mrf.mxu0
        %v552 = vadd.f32 %v529, %v551
        %553 = vdwg.mxu0
        %v554 = vperm.slane %v319, 1
        %v555 = vadd.f32 %v552, %v554
        %v556 = vxor.u32 %v555, 2147483648
        %v557 = vmul.f32 %v556, 1.442695
        %v558 = vpow.pop %v557
        %v559 = vadd.f32 %v558, 1.0
        %v560 = vrcp.pop %v559
        %v561 = vmul.f32 %v559, %v560
        %v562 = vsub.f32 1.0, %v561
        %v563 = vmul.f32 %v560, %v562
        %v564 = vadd.f32 %v560, %v563
        %vm565 = vweird.f32 %v559
        %vm566 = vweird.f32 %v560
        %vm567 = vmor %vm565, %vm566
        %v568 = vsel %vm567, %v560, %v564
        %v569 = vand.u32 2147483647, %v559
        %vm570 = vcmp.eq.f32.partialorder %v569, 8.507059e+37
        %v571 = vand.u32 %v559, 2147483648
        %v572 = vor.u32 1.1754944e-38, %v571
        %v573 = vsel %vm570, %v572, %v568
        %v574 = vmul.f32 1.0, %v573
        %v575 = vtanh.pop %v555
        %577 = vrot.lane.b32.xlu0 %v575, 64
        %v578 = vpop.permute.xlu0 %577
        %v580 = vmul.f32 %v574, %v578
        %v581 = vtanh.pop %v580
        %583 = vrot.lane.b32.xlu0 %v581, 96
        %v584 = vpop.permute.xlu0 %583
        %v586 = vmul.f32 %v574, %v584
        %588 = vrot.lane.b32.xlu0 %v586, 32
        %v589 = vpop.permute.xlu0 %588
        %vm591 = vcmask 254976
        %592 = vst.msk [vmem:[#allocation8] sm:$0x3] %vm591, %v589
        %v593 = vld [vmem:[%s6] sm:$0xff]
        %v594 = vld [vmem:[%s6 + $0x8] sm:$0xff]
        %v595 = vld [vmem:[%s6 + $0x10] sm:$0xff]
        %v596 = vld [vmem:[%s6 + $0x18] sm:$0xff]
        %v597 = vperm.slane %v319, 2
        %v598 = vsel %vm376, %v589, 0
        %600 = vmatpush.msra.mxu0 0.0
        %601 = vmatpush.msra.mxu0 0.0
        %602 = vmatpush.msra.mxu0 0.0
        %603 = vmatpush.msra.mxu0 0.0
        %604 = vmatpush.msra.mxu0 0.0
        %605 = vmatpush.msra.mxu0 0.0
        %606 = vmatpush.msra.mxu0 0.0
        %607 = vmatpush.msra.mxu0 0.0
        %608 = vmatpush.msra.mxu0 0.0
        %609 = vmatpush.msra.mxu0 0.0
        %610 = vmatpush.msra.mxu0 0.0
        %611 = vmatpush.msra.mxu0 0.0
        %612 = vmatpush.msra.mxu0 %v596
        %613 = vmatpush.msra.mxu0 %v595
        %614 = vmatpush.msra.mxu0 %v594
        %615 = vmatpush.msra.mxu0 %v593
        %616 = vmatmul.f32.gmra.mxu0 %v598
        %v617 = vpop.f32.mrf.mxu0
        %v618 = vadd.f32 %v597, %v617
        %619 = vdwg.mxu0
        %vm620 = vcmask 1041408
        %v621 = vsel %vm620, %v618, -inf
        %622 = vmax.xlane.f32.xlu0 %v621
        %v623 = vpop.xlane.xlu0 %622
        %v624 = vsub.f32 %v618, %v623
        %v625 = vmul.f32 %v624, 1.442695
        %v626 = vpow.pop %v625
        %v627 = vsel %vm620, %v626, 0.0
        %628 = vadd.xlane.f32.xlu0 %v627
        %v629 = vpop.xlane.xlu0 %628
        %v630 = vlog2.pop %v629
        %v631 = vmul.f32 %v630, 0.6931472
        %v632 = vsub.f32 %v624, %v631
        %633 = vst [vmem:[%s308] sm:$0x3] %v632
        %p634 = scmp.lt.s32.totalorder %s31, 5
        %s635 = scalar_select %p634, %s31, 5
        %s636 = smul.addr %s635, 2
        %s637 = scalar_lea.vmem %s8, %s636
        // Predicated region
        $region57: #{decoder_attn_decode.1} parent=47 // pred_check
          %p638 = pneg %p196
        $region58: #{decoder_attn_decode.1} parent=47 // pred_check_branch
          %640 = sbr.rel (%p638) target = $region60
        $region59: #{decoder_attn_decode.1} parent=47 // pred_region
          _
        $region60: #{decoder_attn_decode.1} parent=47 // pred_fallthru
          _
        // Predicated region
        $region61: #{decoder_attn_decode.1} parent=47 // pred_check
          %p641 = pneg %p217
        $region62: #{decoder_attn_decode.1} parent=47 // pred_check_branch
          %643 = sbr.rel (%p641) target = $region64
        $region63: #{decoder_attn_decode.1} parent=47 // pred_region
          %645 = vsyncadd [#allocation7], 0
          %s647 = sshll.u32 [#allocation8], 4
          %s648 = int_to_ptr.vmem [resolvable:$true] %s647
          %s649 = sshll.u32 %s9, 4
          %s650 = int_to_ptr.hbm [resolvable:$true] %s649
          %652 = dma.vmem_to_hbm [thread:$0]  %s648, 32, %s650, [#allocation7]
        $region64: #{decoder_attn_decode.1} parent=47 // pred_fallthru
          _
        // Predicated region
        $region65: #{decoder_attn_decode.1} parent=47 // pred_check
          %p653 = pneg %p217
        $region66: #{decoder_attn_decode.1} parent=47 // pred_check_branch
          %655 = sbr.rel (%p653) target = $region68
        $region67: #{decoder_attn_decode.1} parent=47 // pred_region
          %657 = dma.done [#allocation7], 32
        $region68: #{decoder_attn_decode.1} parent=47 // pred_fallthru
          _
      $region48: #{decoder_attn_decode.1} parent=5 // pred_fallthru
        _
      %p658 = scmp.le.s32.totalorder 2, %s26
      // Predicated region
      $region69: #{decoder_attn_decode.1} parent=5 // pred_check
        %p659 = pneg %p658
      $region70: #{decoder_attn_decode.1} parent=5 // pred_check_branch
        %661 = sbr.rel (%p659) target = $region72
      $region71: #{decoder_attn_decode.1} parent=5 // pred_region
        %s662 = ssub.s32 %s26, 2
        // Predicated region
        $region73: #{decoder_attn_decode.1} parent=71 // pred_check
          %p663 = pneg %p202
        $region74: #{decoder_attn_decode.1} parent=71 // pred_check_branch
          %665 = sbr.rel (%p663) target = $region76
        $region75: #{decoder_attn_decode.1} parent=71 // pred_region
          %p666 = scmp.lt.s32.totalorder %s32, 5
          %s667 = scalar_select %p666, %s32, 5
          %s668 = smul.addr %s667, 2
          %s669 = scalar_lea.vmem %s8, %s668
        $region76: #{decoder_attn_decode.1} parent=71 // pred_fallthru
          _
      $region72: #{decoder_attn_decode.1} parent=5 // pred_fallthru
        _
    $region6: #{decoder_attn_decode.1} parent=1 // loop_footer
      %s30 = sadd.s32 1, %s26
    $region7: #{decoder_attn_decode.1} parent=1 // loop_footer_branch
      %25 = sbr.rel target = $region3
    $region8: #{decoder_attn_decode.1} parent=1 // loop_exit
      _
    %670 = vsyncpa [#allocation6], 1
    %s671 = scalar_lea.sflag [#allocation6], 1
    %672 = vsyncpa %s671, 1
    %673 = vsyncpa [#allocation7], 1
    %s674 = scalar_lea.sflag [#allocation7], 1
    %675 = vsyncpa %s674, 1

</llo_original>
